<compile_context>
chip_gen: v5e
topology: v5e:2x2
jax: 0.10.0
libtpu: 0.0.40
codegen_flags: <defaults>
</compile_context>

<pallas_src>
import functools

import jax
import jax.numpy as jnp
from jax.experimental import pallas as pl
from jax.experimental.pallas import tpu as pltpu


def _cross_focal_kernel(*refs, n, num_classes, alpha, gamma, has_weight, has_vmask):
    """One (C, tile_n) column tile; writes per-column partial loss sums."""
    it = iter(refs)
    pred_ref = next(it)                          # (C, tile_n)
    tgt_ref = next(it)                           # (1, tile_n) int32
    w_ref = next(it) if has_weight else None     # (1 or C, tile_n)
    vmask_ref = next(it) if has_vmask else None  # (C, tile_n)
    out_ref = next(it)                           # (1, 1, tile_n)

    c, tile_n = pred_ref.shape

    # Tail mask over lanes (anchors): the last tile may extend past N.
    col = pl.program_id(0) * tile_n + jax.lax.broadcasted_iota(jnp.int32, (1, tile_n), 1)
    valid = col < n                              # (1, tile_n) bool

    pred = pred_ref[...].astype(jnp.float32)
    pred = jnp.where(valid, pred, 0.0)           # sanitize out-of-bounds garbage
    tgt = tgt_ref[...]                           # int32

    # one_hot(targets, C+1)[:, :C] transposed: background label (== num_classes) -> zero column
    class_ids = jax.lax.broadcasted_iota(jnp.int32, (c, tile_n), 0)
    t = (class_ids == tgt).astype(jnp.float32)

    # Shared exp: sigmoid and BCE-with-logits both derived from e = exp(-|x|).
    e = jnp.exp(-jnp.abs(pred))
    r = pl.reciprocal(1.0 + e, approx=True)      # = sigmoid(|x|)
    p = jnp.where(pred >= 0.0, r, e * r)         # = sigmoid(x)

    pt = (1.0 - p) * t + p * (1.0 - t)
    if gamma == 2.0:
        pt_pow = pt * pt                         # gamma==2 specialization (no exp/log)
    else:
        pt_pow = pt ** gamma
    focal_w = (alpha * t + (1.0 - alpha) * (1.0 - t)) * pt_pow

    # numerically-stable binary_cross_entropy_with_logits (same formula as torch)
    bce = jnp.maximum(pred, 0.0) - pred * t + jnp.log1p(e)
    loss = bce * focal_w

    if has_weight:
        loss = loss * w_ref[...].astype(jnp.float32)   # broadcasts (1,tile_n) or elementwise (C,tile_n)

    if has_vmask:
        # cross_mask: valid_label_mask on negative (background) columns, 1 elsewhere.
        # TODO(synk): torch casts the mask to int8 (trunc); assumed binary-valued here.
        neg = (tgt == num_classes)                     # (1, tile_n)
        cross_mask = jnp.where(neg, vmask_ref[...].astype(jnp.float32), 1.0)
        loss = loss * cross_mask

    loss = jnp.where(valid, loss, 0.0)
    # cheap sublane-axis reduce only; full lane reduction deferred to the wrapper
    out_ref[...] = jnp.sum(loss, axis=0, keepdims=True)[None]   # (1, 1, tile_n)


def cross_sigmoid_focal_loss(pred, targets, weight=None, num_classes=None,
                             alpha=0.25, gamma=2.0, reduction="mean",
                             avg_factor=None, valid_label_mask=None,
                             tile_n_max=1024):
    """JAX/Pallas equivalent of the (non-VFL, sigmoid) path of cross_sigmoid_focal_loss."""
    n, c = pred.shape
    if num_classes is None:
        num_classes = c

    # lane-dense layout: classes on sublanes, anchors on lanes
    pred_t = jnp.transpose(pred)                       # (C, N), keep storage dtype
    tgt_t = targets.astype(jnp.int32).reshape(1, n)    # (1, N)

    # Tile selection: single full-extent tile when N fits, else 128-aligned tiles with
    # a masked partial tail (no HBM-copy padding).
    tile_n_max = max(128, (int(tile_n_max) // 128) * 128)
    tile_n = n if n <= tile_n_max else tile_n_max
    num_tiles = pl.cdiv(n, tile_n)

    operands = [pred_t, tgt_t]
    in_specs = [
        pl.BlockSpec((c, tile_n), lambda i: (0, i)),
        pl.BlockSpec((1, tile_n), lambda i: (0, i)),
    ]

    has_weight = weight is not None
    if has_weight:
        if weight.ndim == 1:
            w_t = weight.reshape(1, n)                 # per-anchor weight
        elif weight.shape == (n, c):
            w_t = jnp.transpose(weight)                # full per-element weight
        else:
            raise ValueError(f"unsupported weight shape {weight.shape}")
        operands.append(w_t)
        w_rows = w_t.shape[0]
        in_specs.append(pl.BlockSpec((w_rows, tile_n), lambda i: (0, i)))

    has_vmask = valid_label_mask is not None
    if has_vmask:
        operands.append(jnp.transpose(valid_label_mask))   # (C, N)
        in_specs.append(pl.BlockSpec((c, tile_n), lambda i: (0, i)))

    kernel = functools.partial(
        _cross_focal_kernel, n=n, num_classes=num_classes, alpha=alpha,
        gamma=gamma, has_weight=has_weight, has_vmask=has_vmask)

    partials = pl.pallas_call(
        kernel,
        out_shape=jax.ShapeDtypeStruct((num_tiles, 1, tile_n), jnp.float32),
        grid=(num_tiles,),
        in_specs=in_specs,
        out_specs=pl.BlockSpec((1, 1, tile_n), lambda i: (i, 0, 0)),
        compiler_params=pltpu.CompilerParams(
            dimension_semantics=("parallel",)),      # independent tiles -> both TCs on v7x
    )(*operands)

    loss_sum = jnp.sum(partials)                     # final reduce in XLA (pairwise, accurate)

    if reduction == "mean":
        denom = jnp.float32(n * c) if avg_factor is None else jnp.float32(avg_factor)
        return loss_sum / denom
    if reduction == "sum":
        return loss_sum
    # TODO(synk): reduction='none' (per-element loss map) not wired through this kernel.
    raise NotImplementedError("reduction='none' not implemented in this kernel")


class CrossSigmoidFocalLoss:
    """CrossSigmoidFocalLoss (sigmoid focal loss with ignore-label cross mask)."""

    def __init__(self, use_sigmoid=True, num_classes=None, gamma=2.0, alpha=0.25,
                 reduction="mean", loss_weight=1.0, ignore_index=None):
        self.use_sigmoid = use_sigmoid
        self.num_classes = num_classes
        self.gamma = gamma
        self.alpha = alpha
        self.reduction = reduction
        self.loss_weight = loss_weight
        self.ignore_index = ignore_index

    def __call__(self, pred, targets, weight=None, reduction_override=None,
                 avg_factor=None, use_vfl=False, valid_label_mask=None,
                 tile_n_max=1024, **kwargs):
        assert reduction_override in (None, "none", "mean", "sum")
        reduction = reduction_override if reduction_override else self.reduction
        if use_vfl:
            # TODO(synk): varifocal_loss (use_vfl=True) path not implemented.
            raise NotImplementedError("use_vfl=True path not implemented")
        return self.loss_weight * cross_sigmoid_focal_loss(
            pred, targets, weight=weight, num_classes=self.num_classes,
            alpha=self.alpha, gamma=self.gamma, reduction=reduction,
            avg_factor=avg_factor, valid_label_mask=valid_label_mask,
            tile_n_max=tile_n_max)


def _reference_loss(pred, targets, weight, valid_label_mask, num_classes,
                    alpha=0.25, gamma=2.0, reduction="mean"):
    """Pure-JAX reference reproducing the PyTorch semantics."""
    n, c = pred.shape
    pred = pred.astype(jnp.float32)
    t = jax.nn.one_hot(targets, c + 1, dtype=jnp.float32)[:, :c]
    p = jax.nn.sigmoid(pred)
    pt = (1 - p) * t + p * (1 - t)
    focal_w = (alpha * t + (1 - alpha) * (1 - t)) * pt ** gamma
    bce = jnp.maximum(pred, 0.0) - pred * t + jnp.log1p(jnp.exp(-jnp.abs(pred)))
    loss = bce * focal_w
    if weight is not None:
        w = weight if weight.ndim == 2 else weight[:, None]
        loss = loss * w
    if valid_label_mask is not None:
        neg = (targets == num_classes)[:, None]
        loss = loss * jnp.where(neg, valid_label_mask, 1.0)
    if reduction == "sum":
        return jnp.sum(loss)
    return jnp.mean(loss)


if __name__ == "__main__":
    def check(n, c, with_weight, with_mask, reduction, tile_n_max, key):
        k1, k2, k3, k4 = jax.random.split(key, 4)
        pred = jax.random.normal(k1, (n, c), dtype=jnp.float32)
        targets = jax.random.randint(k2, (n,), 0, c + 1)   # label == c means background
        weight = (jax.random.uniform(k3, (n,), dtype=jnp.float32)
                  if with_weight else None)
        vmask = ((jax.random.uniform(k4, (n, c)) > 0.3).astype(jnp.float32)
                 if with_mask else None)

        loss_mod = CrossSigmoidFocalLoss(num_classes=c, gamma=2.0, alpha=0.25,
                                         reduction=reduction, loss_weight=1.0)
        out = loss_mod(pred, targets, weight=weight, valid_label_mask=vmask,
                       tile_n_max=tile_n_max)
        out = jax.block_until_ready(out)

        ref = _reference_loss(pred, targets, weight, vmask, num_classes=c,
                              reduction=reduction)
        assert abs(float(out) - float(ref)) <= 1e-4 + 5e-3 * abs(float(ref)), \
            (n, c, reduction, float(out), float(ref))

    key = jax.random.PRNGKey(0)
    k0, k1, k2 = jax.random.split(key, 3)
    check(64, 16, True, True, "mean", 1024, k0)    # single full tile
    check(300, 16, True, True, "mean", 128, k1)    # multi-tile + masked partial tail
    check(64, 16, False, False, "sum", 1024, k2)   # specialized: no weight / no mask

    print("KERNEL_OK")
</pallas_src>

<mosaic_0001>
module attributes {stable_mosaic.version = 11 : i64} {
  func.func @_cross_focal_kernel(%arg0: i32, %arg1: memref<16x64xf32, #tpu.memory_space<vmem>>, %arg2: memref<1x64xi32, #tpu.memory_space<vmem>>, %arg3: memref<1x64xf32, #tpu.memory_space<vmem>>, %arg4: memref<16x64xf32, #tpu.memory_space<vmem>>, %arg5: memref<1x1x64xf32, #tpu.memory_space<vmem>>) attributes {dimension_semantics = [#tpu.dimension_semantics<parallel>], iteration_bounds = array<i64: 1>, scalar_prefetch = 0 : i64, scratch_operands = 0 : i64, tpu.core_type = #tpu.core_type<tc>, window_params = [{transform_indices = @transform_0, window_bounds = array<i64: 16, 64>}, {transform_indices = @transform_1, window_bounds = array<i64: 1, 64>}, {transform_indices = @transform_2, window_bounds = array<i64: 1, 64>}, {transform_indices = @transform_3, window_bounds = array<i64: 16, 64>}, {transform_indices = @transform_4, window_bounds = array<i64: 1, 1, 64>}]} {
    %c64_i32 = arith.constant 64 : i32
    %0 = arith.muli %arg0, %c64_i32 : i32
    %1 = tpu.iota {dimensions = array<i32: 1>} : vector<1x64xi32>
    %2 = vector.broadcast %0 : i32 to vector<1x64xi32>
    %3 = arith.addi %2, %1 : vector<1x64xi32>
    %c64_i32_0 = arith.constant 64 : i32
    %4 = vector.broadcast %c64_i32_0 : i32 to vector<1x64xi32>
    %5 = arith.cmpi slt, %3, %4 : vector<1x64xi32>
    %c0 = arith.constant 0 : index
    %c0_1 = arith.constant 0 : index
    %6 = vector.load %arg1[%c0, %c0_1] : memref<16x64xf32, #tpu.memory_space<vmem>>, vector<16x64xf32>
    %cst = arith.constant 0.000000e+00 : f32
    %7 = vector.shape_cast %5 : vector<1x64xi1> to vector<1x64xi1>
    %8 = vector.broadcast %7 : vector<1x64xi1> to vector<16x64xi1>
    %9 = vector.broadcast %cst : f32 to vector<16x64xf32>
    %10 = arith.select %8, %6, %9 : vector<16x64xi1>, vector<16x64xf32>
    %c0_2 = arith.constant 0 : index
    %c0_3 = arith.constant 0 : index
    %11 = vector.load %arg2[%c0_2, %c0_3] : memref<1x64xi32, #tpu.memory_space<vmem>>, vector<1x64xi32>
    %12 = tpu.iota {dimensions = array<i32: 0>} : vector<16x64xi32>
    %13 = vector.broadcast %11 : vector<1x64xi32> to vector<16x64xi32>
    %14 = arith.cmpi eq, %12, %13 : vector<16x64xi32>
    %15 = arith.extui %14 : vector<16x64xi1> to vector<16x64xi32>
    %16 = arith.sitofp %15 : vector<16x64xi32> to vector<16x64xf32>
    %17 = math.absf %10 : vector<16x64xf32>
    %cst_4 = arith.constant 0.000000e+00 : f32
    %18 = vector.broadcast %cst_4 : f32 to vector<16x64xf32>
    %19 = arith.subf %18, %17 : vector<16x64xf32>
    %20 = math.exp %19 : vector<16x64xf32>
    %cst_5 = arith.constant 1.000000e+00 : f32
    %21 = vector.broadcast %cst_5 : f32 to vector<16x64xf32>
    %22 = arith.addf %21, %20 : vector<16x64xf32>
    %23 = tpu.reciprocal %22 {approx = true} : vector<16x64xf32> -> vector<16x64xf32>
    %cst_6 = arith.constant 0.000000e+00 : f32
    %24 = vector.broadcast %cst_6 : f32 to vector<16x64xf32>
    %25 = arith.cmpf oge, %10, %24 : vector<16x64xf32>
    %26 = arith.mulf %20, %23 : vector<16x64xf32>
    %27 = arith.select %25, %23, %26 : vector<16x64xi1>, vector<16x64xf32>
    %cst_7 = arith.constant 1.000000e+00 : f32
    %28 = vector.broadcast %cst_7 : f32 to vector<16x64xf32>
    %29 = arith.subf %28, %27 : vector<16x64xf32>
    %30 = arith.mulf %29, %16 : vector<16x64xf32>
    %cst_8 = arith.constant 1.000000e+00 : f32
    %31 = vector.broadcast %cst_8 : f32 to vector<16x64xf32>
    %32 = arith.subf %31, %16 : vector<16x64xf32>
    %33 = arith.mulf %27, %32 : vector<16x64xf32>
    %34 = arith.addf %30, %33 : vector<16x64xf32>
    %35 = arith.mulf %34, %34 : vector<16x64xf32>
    %cst_9 = arith.constant 2.500000e-01 : f32
    %36 = vector.broadcast %cst_9 : f32 to vector<16x64xf32>
    %37 = arith.mulf %36, %16 : vector<16x64xf32>
    %cst_10 = arith.constant 1.000000e+00 : f32
    %38 = vector.broadcast %cst_10 : f32 to vector<16x64xf32>
    %39 = arith.subf %38, %16 : vector<16x64xf32>
    %cst_11 = arith.constant 7.500000e-01 : f32
    %40 = vector.broadcast %cst_11 : f32 to vector<16x64xf32>
    %41 = arith.mulf %40, %39 : vector<16x64xf32>
    %42 = arith.addf %37, %41 : vector<16x64xf32>
    %43 = arith.mulf %42, %35 : vector<16x64xf32>
    %cst_12 = arith.constant 0.000000e+00 : f32
    %44 = vector.broadcast %cst_12 : f32 to vector<16x64xf32>
    %45 = arith.maximumf %10, %44 : vector<16x64xf32>
    %46 = arith.mulf %10, %16 : vector<16x64xf32>
    %47 = arith.subf %45, %46 : vector<16x64xf32>
    %48 = math.log1p %20 : vector<16x64xf32>
    %49 = arith.addf %47, %48 : vector<16x64xf32>
    %50 = arith.mulf %49, %43 : vector<16x64xf32>
    %c0_13 = arith.constant 0 : index
    %c0_14 = arith.constant 0 : index
    %51 = vector.load %arg3[%c0_13, %c0_14] : memref<1x64xf32, #tpu.memory_space<vmem>>, vector<1x64xf32>
    %52 = vector.broadcast %51 : vector<1x64xf32> to vector<16x64xf32>
    %53 = arith.mulf %50, %52 : vector<16x64xf32>
    %c16_i32 = arith.constant 16 : i32
    %54 = vector.broadcast %c16_i32 : i32 to vector<1x64xi32>
    %55 = arith.cmpi eq, %11, %54 : vector<1x64xi32>
    %c0_15 = arith.constant 0 : index
    %c0_16 = arith.constant 0 : index
    %56 = vector.load %arg4[%c0_15, %c0_16] : memref<16x64xf32, #tpu.memory_space<vmem>>, vector<16x64xf32>
    %cst_17 = arith.constant 1.000000e+00 : f32
    %57 = vector.shape_cast %55 : vector<1x64xi1> to vector<1x64xi1>
    %58 = vector.broadcast %57 : vector<1x64xi1> to vector<16x64xi1>
    %59 = vector.broadcast %cst_17 : f32 to vector<16x64xf32>
    %60 = arith.select %58, %56, %59 : vector<16x64xi1>, vector<16x64xf32>
    %61 = arith.mulf %53, %60 : vector<16x64xf32>
    %cst_18 = arith.constant 0.000000e+00 : f32
    %62 = vector.shape_cast %5 : vector<1x64xi1> to vector<1x64xi1>
    %63 = vector.broadcast %62 : vector<1x64xi1> to vector<16x64xi1>
    %64 = vector.broadcast %cst_18 : f32 to vector<16x64xf32>
    %65 = arith.select %63, %61, %64 : vector<16x64xi1>, vector<16x64xf32>
    %cst_19 = arith.constant dense<0.000000e+00> : vector<64xf32>
    %66 = vector.multi_reduction <add>, %65, %cst_19 [0] : vector<16x64xf32> to vector<64xf32>
    %67 = vector.shape_cast %66 : vector<64xf32> to vector<1x64xf32>
    %68 = vector.shape_cast %67 : vector<1x64xf32> to vector<1x1x64xf32>
    %c0_20 = arith.constant 0 : index
    %c0_21 = arith.constant 0 : index
    %c0_22 = arith.constant 0 : index
    %69 = vector.load %arg5[%c0_20, %c0_21, %c0_22] : memref<1x1x64xf32, #tpu.memory_space<vmem>>, vector<1x1x64xf32>
    tpu.vector_store %arg5[%c0_20, %c0_21, %c0_22], %68 {strides = array<i32>} : memref<1x1x64xf32, #tpu.memory_space<vmem>>, vector<1x1x64xf32>,
    return
  }
  func.func @transform_0(%arg0: i32) -> (i32, i32) {
    %c0_i32 = arith.constant 0 : i32
    %c0_i32_0 = arith.constant 0 : i32
    return %c0_i32, %arg0 : i32, i32
  }
  func.func @transform_1(%arg0: i32) -> (i32, i32) {
    %c0_i32 = arith.constant 0 : i32
    %c0_i32_0 = arith.constant 0 : i32
    return %c0_i32, %arg0 : i32, i32
  }
  func.func @transform_2(%arg0: i32) -> (i32, i32) {
    %c0_i32 = arith.constant 0 : i32
    %c0_i32_0 = arith.constant 0 : i32
    return %c0_i32, %arg0 : i32, i32
  }
  func.func @transform_3(%arg0: i32) -> (i32, i32) {
    %c0_i32 = arith.constant 0 : i32
    %c0_i32_0 = arith.constant 0 : i32
    return %c0_i32, %arg0 : i32, i32
  }
  func.func @transform_4(%arg0: i32) -> (i32, i32, i32) {
    %c0_i32 = arith.constant 0 : i32
    %c0_i32_0 = arith.constant 0 : i32
    %c0_i32_1 = arith.constant 0 : i32
    return %arg0, %c0_i32, %c0_i32_0 : i32, i32, i32
  }
}

</mosaic_0001>

<llo_original>
// kernel: tpu_custom_call.1
$region0: #{tpu_custom_call.1}
  #allocation0 [shape = 'u32[]', space=smem, size = 0x4, offset = 0x4, fixed_abs, tag = 'smem constant byte address 0x4 - core index']
  #allocation1 [shape = 'u32[72,128]{1,0:T(1,128)}', space=vmem, size = 0x9000, scoped, tag = 'internal scratch']
  %s0 = inlined_call_operand.hbm [shape: f32[16,64], index: 0, kind: input, shape index: {}]
  %s1 = inlined_call_operand.hbm [shape: s32[1,64], index: 1, kind: input, shape index: {}]
  %s2 = inlined_call_operand.vmem [shape: f32[1,64], index: 2, kind: input, shape index: {}]
  %s3 = inlined_call_operand.hbm [shape: f32[16,64], index: 3, kind: input, shape index: {}]
  %s4 = inlined_call_operand.hbm [shape: f32[1,1,64], index: 4, kind: output, shape index: {}]
  %s5 = sld [smem:[#allocation0]]
  $region38: #{tpu_custom_call.1} parent=0
    _
  %s7 = ssub.s32 1, %s5
  %s8 = scalar_select 0, %s7, %s5
  $region1: #{tpu_custom_call.1} parent=0
    #allocation2 [shape = 'u8[8192]{0}', space=vmem, size = 0x2000, scoped, tag = 'input window, operand 0, single buffered']
    #allocation3 [shape = 's32[1]{0}', space=sflag, size = 0x4, scoped, tag = 'scoped memory for tpu_custom_call.1']
    #allocation4 [shape = 's32[1]{0}', space=sflag, size = 0x4, scoped, tag = 'scoped memory for tpu_custom_call.1']
    #allocation5 [shape = 'u8[512]{0}', space=vmem, size = 0x400, scoped, tag = 'input window, operand 1, single buffered']
    #allocation6 [shape = 's32[1]{0}', space=sflag, size = 0x4, scoped, tag = 'scoped memory for tpu_custom_call.1']
    #allocation7 [shape = 'u8[8192]{0}', space=vmem, size = 0x2000, scoped, tag = 'input window, operand 3, single buffered']
    #allocation8 [shape = 'u8[512]{0}', space=vmem, size = 0x400, scoped, tag = 'output window, operand 0, single buffered']
    %9 = vsyncpa [#allocation3], 0
    %10 = vsyncpa [#allocation6], 0
    %11 = vsyncpa [#allocation4], 0
    // Predicated region
    $region2: #{tpu_custom_call.1} parent=1 // pred_check
      _
    $region3: #{tpu_custom_call.1} parent=1 // pred_check_branch
      %13 = sbr.rel (0) target = $region5
    $region4: #{tpu_custom_call.1} parent=1 // pred_region
      %15 = vsyncadd [#allocation3], 0
      %s16 = sshll.u32 %s0, 4
      %s17 = int_to_ptr.hbm [resolvable:$true] %s16
      %s18 = sshll.u32 [#allocation2], 4
      %s19 = int_to_ptr.vmem [resolvable:$true] %s18
      %24 = dma.hbm_to_vmem [thread:$0]  %s17, 256, %s19, [#allocation3], 128, 128, 8
    $region5: #{tpu_custom_call.1} parent=1 // pred_fallthru
      _
    // Predicated region
    $region6: #{tpu_custom_call.1} parent=1 // pred_check
      _
    $region7: #{tpu_custom_call.1} parent=1 // pred_check_branch
      %26 = sbr.rel (0) target = $region9
    $region8: #{tpu_custom_call.1} parent=1 // pred_region
      %28 = vsyncadd [#allocation6], 0
      %s30 = sshll.u32 %s1, 4
      %s31 = int_to_ptr.hbm [resolvable:$true] %s30
      %s32 = sshll.u32 [#allocation5], 4
      %s33 = int_to_ptr.vmem [resolvable:$true] %s32
      %35 = dma.hbm_to_vmem [thread:$0]  %s31, 16, %s33, [#allocation6]
    $region9: #{tpu_custom_call.1} parent=1 // pred_fallthru
      _
    // Predicated region
    $region10: #{tpu_custom_call.1} parent=1 // pred_check
      _
    $region11: #{tpu_custom_call.1} parent=1 // pred_check_branch
      %37 = sbr.rel (0) target = $region13
    $region12: #{tpu_custom_call.1} parent=1 // pred_region
      _
    $region13: #{tpu_custom_call.1} parent=1 // pred_fallthru
      _
    // Predicated region
    $region14: #{tpu_custom_call.1} parent=1 // pred_check
      _
    $region15: #{tpu_custom_call.1} parent=1 // pred_check_branch
      %39 = sbr.rel (0) target = $region17
    $region16: #{tpu_custom_call.1} parent=1 // pred_region
      %41 = vsyncadd [#allocation6], 0
      %s42 = sshll.u32 %s3, 4
      %s43 = int_to_ptr.hbm [resolvable:$true] %s42
      %s44 = sshll.u32 [#allocation7], 4
      %s45 = int_to_ptr.vmem [resolvable:$true] %s44
      %50 = dma.hbm_to_vmem [thread:$0]  %s43, 256, %s45, [#allocation6], 128, 128, 8
    $region17: #{tpu_custom_call.1} parent=1 // pred_fallthru
      _
    // Predicated region
    $region18: #{tpu_custom_call.1} parent=1 // pred_check
      _
    $region19: #{tpu_custom_call.1} parent=1 // pred_check_branch
      %52 = sbr.rel (0) target = $region21
    $region20: #{tpu_custom_call.1} parent=1 // pred_region
      %54 = dma.done [#allocation3], 256
    $region21: #{tpu_custom_call.1} parent=1 // pred_fallthru
      _
    // Predicated region
    $region22: #{tpu_custom_call.1} parent=1 // pred_check
      _
    $region23: #{tpu_custom_call.1} parent=1 // pred_check_branch
      %56 = sbr.rel (0) target = $region25
    $region24: #{tpu_custom_call.1} parent=1 // pred_region
      %58 = dma.done [#allocation6], 16
    $region25: #{tpu_custom_call.1} parent=1 // pred_fallthru
      _
    // Predicated region
    $region26: #{tpu_custom_call.1} parent=1 // pred_check
      _
    $region27: #{tpu_custom_call.1} parent=1 // pred_check_branch
      %60 = sbr.rel (0) target = $region29
    $region28: #{tpu_custom_call.1} parent=1 // pred_region
      %62 = dma.done [#allocation6], 256
    $region29: #{tpu_custom_call.1} parent=1 // pred_fallthru
      _
    %s63 = smul.u32 0, 64
    %v64 = vlaneseq
    %v65 = vand.u32 %v64, 127
    %v66 = vstv %s63
    %v67 = vadd.s32 %v66, %v65
    %vm68 = vcmp.lt.s32.totalorder %v67, 64
    %v69 = vld [vmem:[#allocation2] sm:$0xff]
    %v70 = vld [vmem:[#allocation2 + $0x8] sm:$0xff]
    %v71 = vsel %vm68, 1, 0
    %vm72 = vcmp.eq.s32.totalorder %v71, 1
    %v73 = vsel %vm72, %v69, 0.0
    %v74 = vsel %vm72, %v70, 0.0
    %v75 = vld [vmem:[#allocation5] sm:$0x1]
    %v76 = vlaneseq
    %v77 = vshrl.u32 %v76, 7
    %v78 = vadd.s32 %v77, 8
    %v79 = vperm.slane %v75, 0
    %vm80 = vcmp.eq.s32.totalorder %v77, %v79
    %vm81 = vcmp.eq.s32.totalorder %v78, %v79
    %v82 = vsel %vm80, 1, 0
    %v83 = vsel %vm81, 1, 0
    %v84 = vcvt.s32.f32 %v82
    %v85 = vcvt.s32.f32 %v83
    %v86 = vand.u32 2147483647, %v73
    %v87 = vand.u32 2147483647, %v74
    %v88 = vsub.f32 0.0, %v86
    %v89 = vsub.f32 0.0, %v87
    %v90 = vmul.f32 %v88, 1.442695
    %v91 = vpow.pop %v90
    %v92 = vmul.f32 %v89, 1.442695
    %v93 = vpow.pop %v92
    %v94 = vadd.f32 %v91, 1.0
    %v95 = vadd.f32 %v93, 1.0
    %v96 = vrcp.pop %v94
    %v97 = vrcp.pop %v95
    %vm98 = vcmp.ge.f32.partialorder %v73, 0.0
    %vm99 = vcmp.ge.f32.partialorder %v74, 0.0
    %v100 = vmul.f32 %v91, %v96
    %v101 = vmul.f32 %v93, %v97
    %v102 = vsel %vm98, %v96, %v100
    %v103 = vsel %vm99, %v97, %v101
    %v104 = vsub.f32 1.0, %v102
    %v105 = vsub.f32 1.0, %v103
    %v106 = vmul.f32 %v104, %v84
    %v107 = vmul.f32 %v105, %v85
    %v108 = vsub.f32 1.0, %v84
    %v109 = vsub.f32 1.0, %v85
    %v110 = vmul.f32 %v102, %v108
    %v111 = vmul.f32 %v103, %v109
    %v112 = vadd.f32 %v106, %v110
    %v113 = vadd.f32 %v107, %v111
    %v114 = vmul.f32 %v112, %v112
    %v115 = vmul.f32 %v113, %v113
    %v116 = vmul.f32 %v84, 0.25
    %v117 = vmul.f32 %v85, 0.25
    %v118 = vmul.f32 %v108, 0.75
    %v119 = vmul.f32 %v109, 0.75
    %v120 = vadd.f32 %v116, %v118
    %v121 = vadd.f32 %v117, %v119
    %v122 = vmul.f32 %v120, %v114
    %v123 = vmul.f32 %v121, %v115
    %v124 = vmax.f32 %v73, 0.0
    %v125 = vmax.f32 %v74, 0.0
    %v126 = vmul.f32 %v73, %v84
    %v127 = vmul.f32 %v74, %v85
    %v128 = vsub.f32 %v124, %v126
    %v129 = vsub.f32 %v125, %v127
    %v130 = vadd.f32 %v91, 1.0
    %v131 = vlog2.pop %v130
    %v132 = vmul.f32 %v131, 0.6931472
    %v133 = vmul.f32 -0.5, %v91
    %v134 = vadd.f32 %v133, 1.0
    %v135 = vmul.f32 %v134, %v91
    %v136 = vand.u32 2147483647, %v91
    %vm137 = vcmp.lt.f32.partialorder %v136, 0.0004427343
    %v138 = vsel %vm137, %v135, %v132
    %v139 = vadd.f32 %v93, 1.0
    %v140 = vlog2.pop %v139
    %v141 = vmul.f32 %v140, 0.6931472
    %v142 = vmul.f32 -0.5, %v93
    %v143 = vadd.f32 %v142, 1.0
    %v144 = vmul.f32 %v143, %v93
    %v145 = vand.u32 2147483647, %v93
    %vm146 = vcmp.lt.f32.partialorder %v145, 0.0004427343
    %v147 = vsel %vm146, %v144, %v141
    %v148 = vadd.f32 %v128, %v138
    %v149 = vadd.f32 %v129, %v147
    %v150 = vmul.f32 %v148, %v122
    %v151 = vmul.f32 %v149, %v123
    %v152 = vld [vmem:[%s2] sm:$0x1]
    %v154 = vperm.slane %v152, 0
    %v156 = vmul.f32 %v150, %v154
    %v157 = vmul.f32 %v151, %v154
    %vm158 = vcmp.eq.s32.totalorder %v75, 16
    %v159 = vld [vmem:[#allocation7] sm:$0xff]
    %v160 = vld [vmem:[#allocation7 + $0x8] sm:$0xff]
    %v161 = vsel %vm158, 1, 0
    %v162 = vperm.slane %v161, 0
    %vm163 = vcmp.eq.s32.totalorder %v162, 1
    %v164 = vsel %vm163, %v159, 1.0
    %v165 = vsel %vm163, %v160, 1.0
    %v166 = vmul.f32 %v156, %v164
    %v167 = vmul.f32 %v157, %v165
    %v168 = vsel %vm72, %v166, 0.0
    %v169 = vsel %vm72, %v167, 0.0
    %vm170 = vcmask 523264
    %v171 = vsel %vm170, %v168, 0.0
    %v172 = vsel %vm170, %v169, 0.0
    %v173 = vadd.f32 %v171, %v172
    %v174 = vrot.slane %v173, 4
    %v175 = vadd.f32 %v173, %v174
    %v176 = vrot.slane %v175, 2
    %v177 = vadd.f32 %v175, %v176
    %v178 = vrot.slane %v177, 1
    %v179 = vadd.f32 %v177, %v178
    %vm180 = vcmask 516096
    %181 = vst.msk [vmem:[#allocation8] sm:$0x1] %vm180, %v179
    // Predicated region
    $region30: #{tpu_custom_call.1} parent=1 // pred_check
      _
    $region31: #{tpu_custom_call.1} parent=1 // pred_check_branch
      %183 = sbr.rel (0) target = $region33
    $region32: #{tpu_custom_call.1} parent=1 // pred_region
      %185 = vsyncadd [#allocation4], 0
      %s187 = sshll.u32 [#allocation8], 4
      %s188 = int_to_ptr.vmem [resolvable:$true] %s187
      %s189 = sshll.u32 %s4, 4
      %s190 = int_to_ptr.hbm [resolvable:$true] %s189
      %192 = dma.vmem_to_hbm [thread:$0]  %s188, 16, %s190, [#allocation4]
    $region33: #{tpu_custom_call.1} parent=1 // pred_fallthru
      _
    // Predicated region
    $region34: #{tpu_custom_call.1} parent=1 // pred_check
      _
    $region35: #{tpu_custom_call.1} parent=1 // pred_check_branch
      %194 = sbr.rel (0) target = $region37
    $region36: #{tpu_custom_call.1} parent=1 // pred_region
      %196 = dma.done [#allocation4], 16
    $region37: #{tpu_custom_call.1} parent=1 // pred_fallthru
      _
    %197 = vsyncpa [#allocation3], 1
    %198 = vsyncpa [#allocation6], 1
    %199 = vsyncpa [#allocation4], 1

</llo_original>
